<compile_context>
chip_gen: v6e
topology: v6e:2x2x1
jax: 0.10.0
libtpu: 0.0.40
codegen_flags: <defaults>
</compile_context>

<pallas_src>
import jax
import jax.numpy as jnp
from jax.experimental import pallas as pl
from jax.experimental.pallas import tpu as pltpu


def context_atten_kernel(mt_ref, hc_ref, wm_ref, w1_ref, v_ref, alpha_ref, ct_ref):
    B, T, H = mt_ref.shape
    mt3 = mt_ref[...]                                  # (B, T, H) f32
    mt_flat = mt3.reshape(B * T, H)                    # (B*T, H) — sublane-merge, layout-preserving

    # hproj[b] = hc[b] @ W1^T  (== linear1(hc), no bias), fused into the kernel.
    hproj = jax.lax.dot_general(
        hc_ref[...], w1_ref[...], (((1,), (1,)), ((), ())),
        preferred_element_type=jnp.float32)            # (B, H)

    # Main MXU matmul over the whole folded batch: (B*T, H) @ (H, H).
    z = jnp.dot(mt_flat, wm_ref[...], preferred_element_type=jnp.float32)   # (B*T, H)

    # 1_{T,1} @ hproj  ==  broadcast hproj across the T rows of each batch.
    s = jnp.tanh(z.reshape(B, T, H) + hproj[:, None, :])                    # (B, T, H)

    # Scores At^T per batch: contract H against V (passed as a (1, H) row).
    at = jnp.sum(s * v_ref[...], axis=-1)              # (B, T)

    # log_softmax along T (lane axis), max-subtracted.
    m = jnp.max(at, axis=-1, keepdims=True)            # (B, 1)
    lse = jnp.log(jnp.sum(jnp.exp(at - m), axis=-1, keepdims=True))         # (B, 1)
    alpha = at - (m + lse)                             # (B, T)
    alpha_ref[...] = alpha

    # ct[b] = alphat[b] @ Mt[b]  (log-probs, faithfully reproducing the source).
    ct3 = jnp.einsum('bqt,bth->bqh', alpha.reshape(B, 1, T), mt3,
                     preferred_element_type=jnp.float32)                    # (B, 1, H)
    ct_ref[...] = ct3.reshape(B, H)


def context_atten_batched(mt, hc, Wm, W1, V):
    """Batched Context_atten: mt (B,T,H), hc (B,H) -> alphat (B,T), ct (B,H)."""
    B, T, H = mt.shape
    mt = jnp.asarray(mt, jnp.float32)
    hc = jnp.asarray(hc, jnp.float32).reshape(B, H)
    Wm = jnp.asarray(Wm, jnp.float32)
    W1 = jnp.asarray(W1, jnp.float32)
    v_row = jnp.asarray(V, jnp.float32).reshape(1, H)

    cost = pl.CostEstimate(
        flops=2 * B * T * H * H        # Mt @ Wm
              + 2 * B * H * H          # hc @ W1^T
              + 2 * B * T * H          # scores (s . V)
              + 2 * B * T * H,         # ct = alphat @ Mt
        transcendentals=B * T * H + 2 * B * T,   # tanh + exp/log
        bytes_accessed=4 * (B * T * H + B * H + 2 * H * H + H + B * T + B * H),
    )

    vmem = pl.BlockSpec(memory_space=pltpu.MemorySpace.VMEM)
    alphat, ct = pl.pallas_call(
        context_atten_kernel,
        out_shape=(
            jax.ShapeDtypeStruct((B, T), jnp.float32),   # alphat rows
            jax.ShapeDtypeStruct((B, H), jnp.float32),   # ct rows
        ),
        in_specs=[vmem, vmem, vmem, vmem, vmem],          # whole arrays in VMEM, single step
        out_specs=(vmem, vmem),
        cost_estimate=cost,
    )(mt, hc, Wm, W1, v_row)
    return alphat, ct


def context_atten(inputs, hc, Wm, W1, V, *, context_window, hidden_dim):
    """Single-example forward matching the PyTorch module: returns ((1,T), (1,H))."""
    T, H = context_window, hidden_dim
    mt = jnp.asarray(inputs, jnp.float32).reshape(1, T, H)
    alphat, ct = context_atten_batched(mt, jnp.asarray(hc).reshape(1, H), Wm, W1, V)
    return alphat.reshape(1, T), ct.reshape(1, H)


def _reference(inputs, hc, Wm, W1, V, *, context_window, hidden_dim):
    """Pure-JAX reference mirroring the PyTorch code."""
    T, H = context_window, hidden_dim
    Mt = jnp.asarray(inputs, jnp.float32).reshape(T, H)
    h = jnp.asarray(hc, jnp.float32).reshape(1, H)
    hproj = h @ jnp.asarray(W1, jnp.float32).T
    At = jnp.tanh(Mt @ jnp.asarray(Wm, jnp.float32) + hproj) @ jnp.asarray(V, jnp.float32)  # (T, 1)
    a = At.reshape(1, T)
    alphat = a - jax.scipy.special.logsumexp(a, axis=1, keepdims=True)   # log_softmax
    ct = alphat @ Mt
    return alphat, ct


if __name__ == "__main__":
    hidden_dim, context_window, batch = 32, 8, 4

    key = jax.random.PRNGKey(0)
    k_in, k_hc, k_w1 = jax.random.split(key, 3)

    # Parameters (matching __init__ shapes: Wm/V ones, linear1.weight random).
    Wm = jnp.ones((hidden_dim, hidden_dim), jnp.float32)
    V = jnp.ones((hidden_dim, 1), jnp.float32)
    W1 = jax.random.normal(k_w1, (hidden_dim, hidden_dim), jnp.float32) * 0.1

    inputs_b = jax.random.normal(k_in, (batch, context_window, hidden_dim), jnp.float32)
    hc_b = jax.random.normal(k_hc, (batch, hidden_dim), jnp.float32)

    # --- batched: whole batch in one pallas_call, single grid step ---
    alphat_b, ct_b = context_atten_batched(inputs_b, hc_b, Wm, W1, V)
    jax.block_until_ready((alphat_b, ct_b))
    assert alphat_b.shape == (batch, context_window) and ct_b.shape == (batch, hidden_dim)
    for b in range(batch):
        a_ref, c_ref = _reference(inputs_b[b], hc_b[b:b + 1], Wm, W1, V,
                                  context_window=context_window, hidden_dim=hidden_dim)
        assert jnp.allclose(alphat_b[b], a_ref[0], atol=1e-3, rtol=1e-3)
        assert jnp.allclose(ct_b[b], c_ref[0], atol=1e-3, rtol=1e-3)

    # --- single example, exactly the PyTorch forward shapes (1,T) / (1,H) ---
    alphat, ct = context_atten(inputs_b[0], hc_b[0:1], Wm, W1, V,
                               context_window=context_window, hidden_dim=hidden_dim)
    jax.block_until_ready((alphat, ct))
    a_ref, c_ref = _reference(inputs_b[0], hc_b[0:1], Wm, W1, V,
                              context_window=context_window, hidden_dim=hidden_dim)
    assert alphat.shape == (1, context_window) and ct.shape == (1, hidden_dim)
    assert jnp.allclose(alphat, a_ref, atol=1e-3, rtol=1e-3)
    assert jnp.allclose(ct, c_ref, atol=1e-3, rtol=1e-3)

    print("KERNEL_OK")
</pallas_src>

<mosaic_0001>
module attributes {stable_mosaic.version = 11 : i64} {
  func.func @context_atten_kernel(%arg0: memref<4x8x32xf32, #tpu.memory_space<vmem>>, %arg1: memref<4x32xf32, #tpu.memory_space<vmem>>, %arg2: memref<32x32xf32, #tpu.memory_space<vmem>>, %arg3: memref<32x32xf32, #tpu.memory_space<vmem>>, %arg4: memref<1x32xf32, #tpu.memory_space<vmem>>, %arg5: memref<4x8xf32, #tpu.memory_space<vmem>>, %arg6: memref<4x32xf32, #tpu.memory_space<vmem>>) attributes {dimension_semantics = [], scalar_prefetch = 0 : i64, scratch_operands = 0 : i64, tpu.core_type = #tpu.core_type<tc>} {
    %c0 = arith.constant 0 : index
    %c0_0 = arith.constant 0 : index
    %c0_1 = arith.constant 0 : index
    %0 = vector.load %arg0[%c0, %c0_0, %c0_1] : memref<4x8x32xf32, #tpu.memory_space<vmem>>, vector<4x8x32xf32>
    %1 = vector.shape_cast %0 : vector<4x8x32xf32> to vector<32x32xf32>
    %c0_2 = arith.constant 0 : index
    %c0_3 = arith.constant 0 : index
    %2 = vector.load %arg1[%c0_2, %c0_3] : memref<4x32xf32, #tpu.memory_space<vmem>>, vector<4x32xf32>
    %c0_4 = arith.constant 0 : index
    %c0_5 = arith.constant 0 : index
    %3 = vector.load %arg3[%c0_4, %c0_5] : memref<32x32xf32, #tpu.memory_space<vmem>>, vector<32x32xf32>
    %cst = arith.constant dense<0.000000e+00> : vector<4x32xf32>
    %4 = tpu.matmul %2, %3, %cst {dimension_numbers = #tpu.dot_dimension_numbers<[1], [1], [0], [0], [0, 0, 1, 0], [], []>} : vector<4x32xf32>, vector<32x32xf32>, vector<4x32xf32> -> vector<4x32xf32>
    %c0_6 = arith.constant 0 : index
    %c0_7 = arith.constant 0 : index
    %5 = vector.load %arg2[%c0_6, %c0_7] : memref<32x32xf32, #tpu.memory_space<vmem>>, vector<32x32xf32>
    %cst_8 = arith.constant dense<0.000000e+00> : vector<32x32xf32>
    %6 = tpu.matmul %1, %5, %cst_8 {dimension_numbers = #tpu.dot_dimension_numbers<[1], [0], [0], [1], [0, 0, 1, 1], [], []>} : vector<32x32xf32>, vector<32x32xf32>, vector<32x32xf32> -> vector<32x32xf32>
    %7 = vector.shape_cast %6 : vector<32x32xf32> to vector<4x8x32xf32>
    %8 = vector.shape_cast %4 : vector<4x32xf32> to vector<4x1x32xf32>
    %9 = vector.broadcast %8 : vector<4x1x32xf32> to vector<4x8x32xf32>
    %10 = arith.addf %7, %9 : vector<4x8x32xf32>
    %11 = math.tanh %10 : vector<4x8x32xf32>
    %c0_9 = arith.constant 0 : index
    %c0_10 = arith.constant 0 : index
    %12 = vector.load %arg4[%c0_9, %c0_10] : memref<1x32xf32, #tpu.memory_space<vmem>>, vector<1x32xf32>
    %13 = vector.shape_cast %12 : vector<1x32xf32> to vector<1x1x32xf32>
    %14 = vector.broadcast %13 : vector<1x1x32xf32> to vector<4x8x32xf32>
    %15 = arith.mulf %11, %14 : vector<4x8x32xf32>
    %cst_11 = arith.constant dense<0.000000e+00> : vector<4x8xf32>
    %16 = vector.multi_reduction <add>, %15, %cst_11 [2] : vector<4x8x32xf32> to vector<4x8xf32>
    %cst_12 = arith.constant dense<0xFF800000> : vector<4xf32>
    %17 = vector.multi_reduction <maximumf>, %16, %cst_12 [1] : vector<4x8xf32> to vector<4xf32>
    %18 = vector.shape_cast %17 : vector<4xf32> to vector<4x1xf32>
    %19 = vector.broadcast %18 : vector<4x1xf32> to vector<4x8xf32>
    %20 = arith.subf %16, %19 : vector<4x8xf32>
    %21 = math.exp %20 : vector<4x8xf32>
    %cst_13 = arith.constant dense<0.000000e+00> : vector<4xf32>
    %22 = vector.multi_reduction <add>, %21, %cst_13 [1] : vector<4x8xf32> to vector<4xf32>
    %23 = vector.shape_cast %22 : vector<4xf32> to vector<4x1xf32>
    %24 = math.log %23 : vector<4x1xf32>
    %25 = arith.addf %18, %24 : vector<4x1xf32>
    %26 = vector.broadcast %25 : vector<4x1xf32> to vector<4x8xf32>
    %27 = arith.subf %16, %26 : vector<4x8xf32>
    %c0_14 = arith.constant 0 : index
    %c0_15 = arith.constant 0 : index
    %28 = vector.load %arg5[%c0_14, %c0_15] : memref<4x8xf32, #tpu.memory_space<vmem>>, vector<4x8xf32>
    tpu.vector_store %arg5[%c0_14, %c0_15], %27 {strides = array<i32>} : memref<4x8xf32, #tpu.memory_space<vmem>>, vector<4x8xf32>,
    %29 = vector.shape_cast %27 : vector<4x8xf32> to vector<4x1x8xf32>
    "tpu.trace_start"() <{level = 10 : i32, message = "bqt,bth->bqh"}> : () -> ()
    %cst_16 = arith.constant dense<0.000000e+00> : vector<4x1x32xf32>
    %30 = tpu.matmul %29, %0, %cst_16 {dimension_numbers = #tpu.dot_dimension_numbers<[2], [1], [1], [2], [0, 0, 0, 1, 1, 2], [0], [0]>} : vector<4x1x8xf32>, vector<4x8x32xf32>, vector<4x1x32xf32> -> vector<4x1x32xf32>
    "tpu.trace_stop"() : () -> ()
    %31 = vector.shape_cast %30 : vector<4x1x32xf32> to vector<4x32xf32>
    %c0_17 = arith.constant 0 : index
    %c0_18 = arith.constant 0 : index
    %32 = vector.load %arg6[%c0_17, %c0_18] : memref<4x32xf32, #tpu.memory_space<vmem>>, vector<4x32xf32>
    tpu.vector_store %arg6[%c0_17, %c0_18], %31 {strides = array<i32>} : memref<4x32xf32, #tpu.memory_space<vmem>>, vector<4x32xf32>,
    return
  }
}

</mosaic_0001>

<llo_original>
// kernel: tpu_custom_call.1
$region0: #{tpu_custom_call.1}
  #allocation0 [shape = 'u32[]', space=smem, size = 0x4, offset = 0x4, fixed_abs, tag = 'smem constant byte address 0x4 - core index']
  #allocation1 [shape = 'u32[144,128]{1,0:T(1,128)}', space=vmem, size = 0x12000, scoped, tag = 'internal scratch']
  %s0 = inlined_call_operand.hbm [shape: f32[4,8,32], index: 0, kind: input, shape index: {}]
  %s1 = inlined_call_operand.hbm [shape: f32[4,32], index: 1, kind: input, shape index: {}]
  %s2 = inlined_call_operand.hbm [shape: f32[32,32], index: 2, kind: input, shape index: {}]
  %s3 = inlined_call_operand.hbm [shape: f32[32,32], index: 3, kind: input, shape index: {}]
  %s4 = inlined_call_operand.vmem [shape: f32[1,32], index: 4, kind: input, shape index: {}]
  %s5 = inlined_call_operand.hbm [shape: f32[4,8], index: 5, kind: output, shape index: {0}]
  %s6 = inlined_call_operand.hbm [shape: f32[4,32], index: 6, kind: output, shape index: {1}]
  %7 = xla_tuple %s5, %s6
  %s8 = sld [smem:[#allocation0]]
  $region54: #{tpu_custom_call.1} parent=0
    _
  %s10 = ssub.s32 1, %s8
  %s11 = scalar_select 0, %s10, %s8
  $region1: #{tpu_custom_call.1} parent=0
    #allocation2 [shape = 'u8[16384]{0}', space=vmem, size = 0x4000, scoped, tag = 'input window, operand 0, single buffered']
    #allocation3 [shape = 's32[1]{0}', space=sflag, size = 0x4, scoped, tag = 'scoped memory for tpu_custom_call.1']
    #allocation4 [shape = 's32[1]{0}', space=sflag, size = 0x4, scoped, tag = 'scoped memory for tpu_custom_call.1']
    #allocation5 [shape = 'u8[2048]{0}', space=vmem, size = 0x800, scoped, tag = 'input window, operand 1, single buffered']
    #allocation6 [shape = 's32[1]{0}', space=sflag, size = 0x4, scoped, tag = 'scoped memory for tpu_custom_call.1']
    #allocation7 [shape = 'u8[16384]{0}', space=vmem, size = 0x4000, scoped, tag = 'input window, operand 2, single buffered']
    #allocation8 [shape = 'u8[16384]{0}', space=vmem, size = 0x4000, scoped, tag = 'input window, operand 3, single buffered']
    #allocation9 [shape = 's32[1]{0}', space=sflag, size = 0x4, scoped, tag = 'scoped memory for tpu_custom_call.1']
    #allocation10 [shape = 'u8[2048]{0}', space=vmem, size = 0x800, scoped, tag = 'output window, operand 0, single buffered']
    #allocation11 [shape = 'u8[2048]{0}', space=vmem, size = 0x800, scoped, tag = 'output window, operand 1, single buffered']
    #allocation12 [shape = 's32[1]{0}', space=sflag, size = 0x4, scoped, tag = 'scoped memory for tpu_custom_call.1']
    %12 = vsyncpa [#allocation3], 0
    %13 = vsyncpa [#allocation6], 0
    %14 = vsyncpa [#allocation9], 0
    %15 = vsyncpa [#allocation4], 0
    %16 = vsyncpa [#allocation12], 0
    // Predicated region
    $region2: #{tpu_custom_call.1} parent=1 // pred_check
      _
    $region3: #{tpu_custom_call.1} parent=1 // pred_check_branch
      %18 = sbr.rel (0) target = $region5
    $region4: #{tpu_custom_call.1} parent=1 // pred_region
      %s20 = ssub.s32 512, 512
      %21 = vsyncadd [#allocation3], %s20
      %s22 = sshll.u32 [#allocation2], 4
      %s23 = int_to_ptr.vmem [resolvable:$true] %s22
      %28 = dma.hbm_to_vmem [thread:$0]  %s0, 512, %s23, [#allocation3], 128, 128, 8
    $region5: #{tpu_custom_call.1} parent=1 // pred_fallthru
      _
    // Predicated region
    $region6: #{tpu_custom_call.1} parent=1 // pred_check
      _
    $region7: #{tpu_custom_call.1} parent=1 // pred_check_branch
      %30 = sbr.rel (0) target = $region9
    $region8: #{tpu_custom_call.1} parent=1 // pred_region
      %s32 = ssub.s32 64, 64
      %33 = vsyncadd [#allocation6], %s32
      %s35 = sshll.u32 [#allocation5], 4
      %s36 = int_to_ptr.vmem [resolvable:$true] %s35
      %38 = dma.hbm_to_vmem [thread:$0]  %s1, 64, %s36, [#allocation6]
    $region9: #{tpu_custom_call.1} parent=1 // pred_fallthru
      _
    // Predicated region
    $region10: #{tpu_custom_call.1} parent=1 // pred_check
      _
    $region11: #{tpu_custom_call.1} parent=1 // pred_check_branch
      %40 = sbr.rel (0) target = $region13
    $region12: #{tpu_custom_call.1} parent=1 // pred_region
      %s42 = ssub.s32 512, 512
      %43 = vsyncadd [#allocation6], %s42
      %s44 = sshll.u32 [#allocation7], 4
      %s45 = int_to_ptr.vmem [resolvable:$true] %s44
      %50 = dma.hbm_to_vmem [thread:$0]  %s2, 512, %s45, [#allocation6], 128, 128, 8
    $region13: #{tpu_custom_call.1} parent=1 // pred_fallthru
      _
    // Predicated region
    $region14: #{tpu_custom_call.1} parent=1 // pred_check
      _
    $region15: #{tpu_custom_call.1} parent=1 // pred_check_branch
      %52 = sbr.rel (0) target = $region17
    $region16: #{tpu_custom_call.1} parent=1 // pred_region
      %s54 = ssub.s32 512, 512
      %55 = vsyncadd [#allocation9], %s54
      %s56 = sshll.u32 [#allocation8], 4
      %s57 = int_to_ptr.vmem [resolvable:$true] %s56
      %62 = dma.hbm_to_vmem [thread:$0]  %s3, 512, %s57, [#allocation9], 128, 128, 8
    $region17: #{tpu_custom_call.1} parent=1 // pred_fallthru
      _
    // Predicated region
    $region18: #{tpu_custom_call.1} parent=1 // pred_check
      _
    $region19: #{tpu_custom_call.1} parent=1 // pred_check_branch
      %64 = sbr.rel (0) target = $region21
    $region20: #{tpu_custom_call.1} parent=1 // pred_region
      _
    $region21: #{tpu_custom_call.1} parent=1 // pred_fallthru
      _
    // Predicated region
    $region22: #{tpu_custom_call.1} parent=1 // pred_check
      _
    $region23: #{tpu_custom_call.1} parent=1 // pred_check_branch
      %66 = sbr.rel (0) target = $region25
    $region24: #{tpu_custom_call.1} parent=1 // pred_region
      %67 = dma.done [#allocation3], 512
    $region25: #{tpu_custom_call.1} parent=1 // pred_fallthru
      _
    // Predicated region
    $region26: #{tpu_custom_call.1} parent=1 // pred_check
      _
    $region27: #{tpu_custom_call.1} parent=1 // pred_check_branch
      %69 = sbr.rel (0) target = $region29
    $region28: #{tpu_custom_call.1} parent=1 // pred_region
      %70 = dma.done [#allocation6], 64
    $region29: #{tpu_custom_call.1} parent=1 // pred_fallthru
      _
    // Predicated region
    $region30: #{tpu_custom_call.1} parent=1 // pred_check
      _
    $region31: #{tpu_custom_call.1} parent=1 // pred_check_branch
      %72 = sbr.rel (0) target = $region33
    $region32: #{tpu_custom_call.1} parent=1 // pred_region
      %73 = dma.done [#allocation6], 512
    $region33: #{tpu_custom_call.1} parent=1 // pred_fallthru
      _
    // Predicated region
    $region34: #{tpu_custom_call.1} parent=1 // pred_check
      _
    $region35: #{tpu_custom_call.1} parent=1 // pred_check_branch
      %75 = sbr.rel (0) target = $region37
    $region36: #{tpu_custom_call.1} parent=1 // pred_region
      %76 = dma.done [#allocation9], 512
    $region37: #{tpu_custom_call.1} parent=1 // pred_fallthru
      _
    %v77 = vld [vmem:[#allocation2] sm:$0xff]
    %v78 = vld [vmem:[#allocation2 + $0x8] sm:$0xff]
    %v79 = vld [vmem:[#allocation2 + $0x10] sm:$0xff]
    %v80 = vld [vmem:[#allocation2 + $0x18] sm:$0xff]
    %v81 = vld [vmem:[#allocation5] sm:$0xf]
    %v82 = vld [vmem:[#allocation8] sm:$0xff]
    %v83 = vld [vmem:[#allocation8 + $0x8] sm:$0xff]
    %v84 = vld [vmem:[#allocation8 + $0x10] sm:$0xff]
    %v85 = vld [vmem:[#allocation8 + $0x18] sm:$0xff]
    %vm86 = vcmask 261120
    %v88 = vsel %vm86, %v81, 0
    %v91 = vsel %vm86, %v82, 0
    %v94 = vsel %vm86, %v83, 0
    %v97 = vsel %vm86, %v84, 0
    %v100 = vsel %vm86, %v85, 0
    %102 = vmatprep.subr.mxu0 0.0
    %103 = vmatpush1.xpose.msra.mxu0 0.0
    %104 = vmatprep.subr.mxu0 0.0
    %105 = vmatpush1.xpose.msra.mxu0 0.0
    %106 = vmatprep.subr.mxu0 0.0
    %107 = vmatpush1.xpose.msra.mxu0 0.0
    %108 = vmatprep.subr.mxu0 0.0
    %109 = vmatpush1.xpose.msra.mxu0 0.0
    %110 = vmatprep.subr.mxu0 0.0
    %111 = vmatpush1.xpose.msra.mxu0 0.0
    %112 = vmatprep.subr.mxu0 0.0
    %113 = vmatpush1.xpose.msra.mxu0 0.0
    %114 = vmatprep.subr.mxu0 0.0
    %115 = vmatpush1.xpose.msra.mxu0 0.0
    %116 = vmatprep.subr.mxu0 0.0
    %117 = vmatpush1.xpose.msra.mxu0 0.0
    %118 = vmatprep.subr.mxu0 0.0
    %119 = vmatpush1.xpose.msra.mxu0 0.0
    %120 = vmatprep.subr.mxu0 0.0
    %121 = vmatpush1.xpose.msra.mxu0 0.0
    %122 = vmatprep.subr.mxu0 0.0
    %123 = vmatpush1.xpose.msra.mxu0 0.0
    %124 = vmatprep.subr.mxu0 0.0
    %125 = vmatpush1.xpose.msra.mxu0 0.0
    %126 = vmatprep.subr.mxu0 0.0
    %127 = vmatpush1.xpose.msra.mxu0 %v100
    %128 = vmatprep.subr.mxu0 0.0
    %129 = vmatpush1.xpose.msra.mxu0 %v97
    %130 = vmatprep.subr.mxu0 0.0
    %131 = vmatpush1.xpose.msra.mxu0 %v94
    %132 = vmatprep.subr.mxu0 0.0
    %133 = vmatpush1.xpose.msra.mxu0 %v91
    %134 = vmatprep.subr.mxu0 0.0
    %135 = vmatpush2.xpose.msra.mxu0 0.0
    %136 = vmatprep.subr.mxu0 0.0
    %137 = vmatpush2.xpose.msra.mxu0 0.0
    %138 = vmatprep.subr.mxu0 0.0
    %139 = vmatpush2.xpose.msra.mxu0 0.0
    %140 = vmatprep.subr.mxu0 0.0
    %141 = vmatpush2.xpose.msra.mxu0 0.0
    %142 = vmatprep.subr.mxu0 0.0
    %143 = vmatpush2.xpose.msra.mxu0 0.0
    %144 = vmatprep.subr.mxu0 0.0
    %145 = vmatpush2.xpose.msra.mxu0 0.0
    %146 = vmatprep.subr.mxu0 0.0
    %147 = vmatpush2.xpose.msra.mxu0 0.0
    %148 = vmatprep.subr.mxu0 0.0
    %149 = vmatpush2.xpose.msra.mxu0 0.0
    %150 = vmatprep.subr.mxu0 0.0
    %151 = vmatpush2.xpose.msra.mxu0 0.0
    %152 = vmatprep.subr.mxu0 0.0
    %153 = vmatpush2.xpose.msra.mxu0 0.0
    %154 = vmatprep.subr.mxu0 0.0
    %155 = vmatpush2.xpose.msra.mxu0 0.0
    %156 = vmatprep.subr.mxu0 0.0
    %157 = vmatpush2.xpose.msra.mxu0 0.0
    %158 = vmatprep.subr.mxu0 0.0
    %159 = vmatpush2.xpose.msra.mxu0 0.0
    %160 = vmatprep.subr.mxu0 0.0
    %161 = vmatpush2.xpose.msra.mxu0 0.0
    %162 = vmatprep.subr.mxu0 0.0
    %163 = vmatpush2.xpose.msra.mxu0 0.0
    %164 = vmatprep.subr.mxu0 0.0
    %165 = vmatpush2.xpose.msra.mxu0 0.0
    %166 = vmatprep.mubr.f32.mxu0 0.0
    %167 = vmatmul.mubr.f32.gmra.mxu0 %v88
    %v168 = vpop.f32.mrf.mxu0
    %v169 = vadd.f32 0.0, %v168
    %v170 = vpop.f32.mrf.mxu0
    %171 = vdwg.mxu0
    %v172 = vld [vmem:[#allocation7] sm:$0xff]
    %v173 = vld [vmem:[#allocation7 + $0x8] sm:$0xff]
    %v174 = vld [vmem:[#allocation7 + $0x10] sm:$0xff]
    %v175 = vld [vmem:[#allocation7 + $0x18] sm:$0xff]
    %v177 = vsel %vm86, %v77, 0
    %v180 = vsel %vm86, %v78, 0
    %v183 = vsel %vm86, %v79, 0
    %v186 = vsel %vm86, %v80, 0
    %188 = vmatprep.subr.mxu0 0.0
    %189 = vmatpush1.msra.mxu0 0.0
    %190 = vmatprep.subr.mxu0 0.0
    %191 = vmatpush1.msra.mxu0 0.0
    %192 = vmatprep.subr.mxu0 0.0
    %193 = vmatpush1.msra.mxu0 0.0
    %194 = vmatprep.subr.mxu0 0.0
    %195 = vmatpush1.msra.mxu0 0.0
    %196 = vmatprep.subr.mxu0 0.0
    %197 = vmatpush1.msra.mxu0 0.0
    %198 = vmatprep.subr.mxu0 0.0
    %199 = vmatpush1.msra.mxu0 0.0
    %200 = vmatprep.subr.mxu0 0.0
    %201 = vmatpush1.msra.mxu0 0.0
    %202 = vmatprep.subr.mxu0 0.0
    %203 = vmatpush1.msra.mxu0 0.0
    %204 = vmatprep.subr.mxu0 0.0
    %205 = vmatpush1.msra.mxu0 0.0
    %206 = vmatprep.subr.mxu0 0.0
    %207 = vmatpush1.msra.mxu0 0.0
    %208 = vmatprep.subr.mxu0 0.0
    %209 = vmatpush1.msra.mxu0 0.0
    %210 = vmatprep.subr.mxu0 0.0
    %211 = vmatpush1.msra.mxu0 0.0
    %212 = vmatprep.subr.mxu0 0.0
    %213 = vmatpush1.msra.mxu0 %v175
    %214 = vmatprep.subr.mxu0 0.0
    %215 = vmatpush1.msra.mxu0 %v174
    %216 = vmatprep.subr.mxu0 0.0
    %217 = vmatpush1.msra.mxu0 %v173
    %218 = vmatprep.subr.mxu0 0.0
    %219 = vmatpush1.msra.mxu0 %v172
    %220 = vmatprep.subr.mxu0 0.0
    %221 = vmatpush2.msra.mxu0 0.0
    %222 = vmatprep.subr.mxu0 0.0
    %223 = vmatpush2.msra.mxu0 0.0
    %224 = vmatprep.subr.mxu0 0.0
    %225 = vmatpush2.msra.mxu0 0.0
    %226 = vmatprep.subr.mxu0 0.0
    %227 = vmatpush2.msra.mxu0 0.0
    %228 = vmatprep.subr.mxu0 0.0
    %229 = vmatpush2.msra.mxu0 0.0
    %230 = vmatprep.subr.mxu0 0.0
    %231 = vmatpush2.msra.mxu0 0.0
    %232 = vmatprep.subr.mxu0 0.0
    %233 = vmatpush2.msra.mxu0 0.0
    %234 = vmatprep.subr.mxu0 0.0
    %235 = vmatpush2.msra.mxu0 0.0
    %236 = vmatprep.subr.mxu0 0.0
    %237 = vmatpush2.msra.mxu0 0.0
    %238 = vmatprep.subr.mxu0 0.0
    %239 = vmatpush2.msra.mxu0 0.0
    %240 = vmatprep.subr.mxu0 0.0
    %241 = vmatpush2.msra.mxu0 0.0
    %242 = vmatprep.subr.mxu0 0.0
    %243 = vmatpush2.msra.mxu0 0.0
    %244 = vmatprep.subr.mxu0 0.0
    %245 = vmatpush2.msra.mxu0 0.0
    %246 = vmatprep.subr.mxu0 0.0
    %247 = vmatpush2.msra.mxu0 0.0
    %248 = vmatprep.subr.mxu0 0.0
    %249 = vmatpush2.msra.mxu0 0.0
    %250 = vmatprep.subr.mxu0 0.0
    %251 = vmatpush2.msra.mxu0 0.0
    %252 = vmatprep.mubr.f32.mxu0 0.0
    %253 = vmatmul.mubr.f32.gmra.mxu0 %v177
    %v254 = vpop.f32.mrf.mxu0
    %v255 = vadd.f32 0.0, %v254
    %v256 = vpop.f32.mrf.mxu0
    %257 = vmatprep.mubr.f32.mxu0 0.0
    %258 = vmatmul.mubr.f32.gmra.mxu0 %v180
    %v259 = vpop.f32.mrf.mxu0
    %v260 = vadd.f32 0.0, %v259
    %v261 = vpop.f32.mrf.mxu0
    %262 = vmatprep.mubr.f32.mxu0 0.0
    %263 = vmatmul.mubr.f32.gmra.mxu0 %v183
    %v264 = vpop.f32.mrf.mxu0
    %v265 = vadd.f32 0.0, %v264
    %v266 = vpop.f32.mrf.mxu0
    %267 = vmatprep.mubr.f32.mxu0 0.0
    %268 = vmatmul.mubr.f32.gmra.mxu0 %v186
    %v269 = vpop.f32.mrf.mxu0
    %v270 = vadd.f32 0.0, %v269
    %v271 = vpop.f32.mrf.mxu0
    %272 = vdwg.mxu0
    %v275 = vunpack.c.l.s4 1966171168
    %v276 = vunpack.c.0.s8 %v275
    %v277 = vlaneseq
    %v278 = vshrl.u32 %v277, 7
    %v279 = vsub.s32 %v276, %v278
    %v280 = vrot.slane %v169, %v279
    %v281 = vcombine.high %v280, %v280
    %v283 = vunpack.c.l.s4 1966171168
    %v284 = vunpack.c.0.s8 %v283
    %v285 = vlaneseq
    %v286 = vshrl.u32 %v285, 7
    %v287 = vsub.s32 %v284, %v286
    %v288 = vrot.slane %v280, %v287
    %v290 = vunpack.c.l.s4 1966171168
    %v291 = vunpack.c.0.s8 %v290
    %v292 = vlaneseq
    %v293 = vshrl.u32 %v292, 7
    %v294 = vsub.s32 %v291, %v293
    %v295 = vrot.slane %v281, %v294
    %v296 = vcombine.high %v288, %v288
    %v297 = vcombine.high %v295, %v295
    %v298 = vlaneseq
    %v299 = vshrl.u32 %v298, 7
    %v300 = vsub.s32 0, %v299
    %v301 = vrot.slane %v288, %v300
    %v302 = vlaneseq
    %v303 = vshrl.u32 %v302, 7
    %v304 = vsub.s32 0, %v303
    %v305 = vrot.slane %v295, %v304
    %v306 = vlaneseq
    %v307 = vshrl.u32 %v306, 7
    %v308 = vsub.s32 0, %v307
    %v309 = vrot.slane %v296, %v308
    %v310 = vlaneseq
    %v311 = vshrl.u32 %v310, 7
    %v312 = vsub.s32 0, %v311
    %v313 = vrot.slane %v297, %v312
    %v318 = vadd.f32 %v255, %v301
    %v319 = vadd.f32 %v260, %v305
    %v320 = vadd.f32 %v265, %v309
    %v321 = vadd.f32 %v270, %v313
    %v322 = vtanh.pop %v318
    %v323 = vtanh.pop %v319
    %v324 = vtanh.pop %v320
    %v325 = vtanh.pop %v321
    %v326 = vld [vmem:[%s4] sm:$0x1]
    %v328 = vlaneseq
    %v329 = vshrl.u32 %v328, 7
    %v330 = vsub.s32 0, %v329
    %v331 = vrot.slane %v326, %v330
    %v333 = vmul.f32 %v322, %v331
    %v334 = vmul.f32 %v323, %v331
    %v335 = vmul.f32 %v324, %v331
    %v336 = vmul.f32 %v325, %v331
    %v337 = vsel %vm86, %v333, 0.0
    %338 = vadd.xlane.f32.xlu0 %v337
    %v339 = vpop.xlane.xlu0 %338
    %v340 = vsel %vm86, %v334, 0.0
    %341 = vadd.xlane.f32.xlu0 %v340
    %v342 = vpop.xlane.xlu0 %341
    %v343 = vsel %vm86, %v335, 0.0
    %344 = vadd.xlane.f32.xlu0 %v343
    %v345 = vpop.xlane.xlu0 %344
    %v346 = vsel %vm86, %v336, 0.0
    %347 = vadd.xlane.f32.xlu0 %v346
    %v348 = vpop.xlane.xlu0 %347
    %v353 = vlaneseq
    %v354 = vand.u32 %v353, 127
    %v355 = vlaneseq
    %v356 = vshrl.u32 %v355, 7
    %v357 = vsub.s32 %v354, %v356
    %v358 = vrot.slane %v339, %v357
    %v359 = vlaneseq
    %v360 = vshrl.u32 %v359, 7
    %v361 = vsub.s32 %v354, %v360
    %v362 = vrot.slane %v342, %v361
    %v363 = vlaneseq
    %v364 = vshrl.u32 %v363, 7
    %v365 = vsub.s32 %v354, %v364
    %v366 = vrot.slane %v345, %v365
    %v367 = vlaneseq
    %v368 = vshrl.u32 %v367, 7
    %v369 = vsub.s32 %v354, %v368
    %v370 = vrot.slane %v348, %v369
    %vm371 = vcmask 1041409
    %v372 = vsel %vm371, %v362, %v358
    %vm373 = vcmask 1042434
    %v374 = vsel %vm373, %v366, %v372
    %vm375 = vcmask 1043459
    %v376 = vsel %vm375, %v370, %v374
    %vm378 = vcmask 60416
    %v379 = vsel %vm378, %v376, -inf
    %380 = vmax.xlane.f32.xlu0 %v379
    %v381 = vpop.xlane.xlu0 %380
    %v383 = vlaneseq
    %v384 = vshrl.u32 %v383, 7
    %v385 = vsub.s32 0, %v384
    %v386 = vrot.slane %v381, %v385
    %v387 = vlaneseq
    %v388 = vshrl.u32 %v387, 7
    %v389 = vsub.s32 1, %v388
    %v390 = vrot.slane %v381, %v389
    %v391 = vlaneseq
    %v392 = vshrl.u32 %v391, 7
    %v393 = vsub.s32 2, %v392
    %v394 = vrot.slane %v381, %v393
    %v395 = vlaneseq
    %v396 = vshrl.u32 %v395, 7
    %v397 = vsub.s32 3, %v396
    %v398 = vrot.slane %v381, %v397
    %v403 = vsub.f32 %v339, %v386
    %v404 = vsub.f32 %v342, %v390
    %v405 = vsub.f32 %v345, %v394
    %v406 = vsub.f32 %v348, %v398
    %v407 = vmul.f32 %v403, 1.442695
    %v408 = vpow.pop %v407
    %v409 = vmul.f32 %v404, 1.442695
    %v410 = vpow.pop %v409
    %v411 = vmul.f32 %v405, 1.442695
    %v412 = vpow.pop %v411
    %v413 = vmul.f32 %v406, 1.442695
    %v414 = vpow.pop %v413
    %419 = vset.pattern.permute.xlu0 0
    %420 = vperm.xlu0 %419, %v408
    %v421 = vpop.permute.xlu0 %420
    %422 = vset.pattern.permute.xlu0 0
    %423 = vperm.xlu0 %422, %v410
    %v424 = vpop.permute.xlu0 %423
    %425 = vset.pattern.permute.xlu0 0
    %426 = vperm.xlu0 %425, %v412
    %v427 = vpop.permute.xlu0 %426
    %428 = vset.pattern.permute.xlu0 0
    %429 = vperm.xlu0 %428, %v414
    %v430 = vpop.permute.xlu0 %429
    %v431 = vlaneseq
    %v432 = vshrl.u32 %v431, 7
    %v433 = vsub.s32 %v354, %v432
    %v434 = vrot.slane %v421, %v433
    %v435 = vlaneseq
    %v436 = vshrl.u32 %v435, 7
    %v437 = vsub.s32 %v354, %v436
    %v438 = vrot.slane %v424, %v437
    %v439 = vlaneseq
    %v440 = vshrl.u32 %v439, 7
    %v441 = vsub.s32 %v354, %v440
    %v442 = vrot.slane %v427, %v441
    %v443 = vlaneseq
    %v444 = vshrl.u32 %v443, 7
    %v445 = vsub.s32 %v354, %v444
    %v446 = vrot.slane %v430, %v445
    %v447 = vsel %vm371, %v438, %v434
    %v448 = vsel %vm373, %v442, %v447
    %v449 = vsel %vm375, %v446, %v448
    %v451 = vsel %vm378, %v449, 0.0
    %452 = vadd.xlane.f32.xlu0 %v451
    %v453 = vpop.xlane.xlu0 %452
    %v454 = vlog2.pop %v453
    %v455 = vmul.f32 %v454, 0.6931472
    %v456 = vadd.f32 %v381, %v455
    %v458 = vlaneseq
    %v459 = vshrl.u32 %v458, 7
    %v460 = vsub.s32 0, %v459
    %v461 = vrot.slane %v456, %v460
    %v462 = vlaneseq
    %v463 = vshrl.u32 %v462, 7
    %v464 = vsub.s32 1, %v463
    %v465 = vrot.slane %v456, %v464
    %v466 = vlaneseq
    %v467 = vshrl.u32 %v466, 7
    %v468 = vsub.s32 2, %v467
    %v469 = vrot.slane %v456, %v468
    %v470 = vlaneseq
    %v471 = vshrl.u32 %v470, 7
    %v472 = vsub.s32 3, %v471
    %v473 = vrot.slane %v456, %v472
    %v478 = vsub.f32 %v339, %v461
    %v479 = vsub.f32 %v342, %v465
    %v480 = vsub.f32 %v345, %v469
    %v481 = vsub.f32 %v348, %v473
    %486 = vset.pattern.permute.xlu0 0
    %487 = vperm.xlu0 %486, %v478
    %v488 = vpop.permute.xlu0 %487
    %489 = vset.pattern.permute.xlu0 0
    %490 = vperm.xlu0 %489, %v479
    %v491 = vpop.permute.xlu0 %490
    %492 = vset.pattern.permute.xlu0 0
    %493 = vperm.xlu0 %492, %v480
    %v494 = vpop.permute.xlu0 %493
    %495 = vset.pattern.permute.xlu0 0
    %496 = vperm.xlu0 %495, %v481
    %v497 = vpop.permute.xlu0 %496
    %v498 = vlaneseq
    %v499 = vshrl.u32 %v498, 7
    %v500 = vsub.s32 %v354, %v499
    %v501 = vrot.slane %v488, %v500
    %v502 = vlaneseq
    %v503 = vshrl.u32 %v502, 7
    %v504 = vsub.s32 %v354, %v503
    %v505 = vrot.slane %v491, %v504
    %v506 = vlaneseq
    %v507 = vshrl.u32 %v506, 7
    %v508 = vsub.s32 %v354, %v507
    %v509 = vrot.slane %v494, %v508
    %v510 = vlaneseq
    %v511 = vshrl.u32 %v510, 7
    %v512 = vsub.s32 %v354, %v511
    %v513 = vrot.slane %v497, %v512
    %v514 = vsel %vm371, %v505, %v501
    %v515 = vsel %vm373, %v509, %v514
    %v516 = vsel %vm375, %v513, %v515
    %518 = vst.msk [vmem:[#allocation10] sm:$0xf] %vm378, %v516
    %vm519 = vcmask 64512
    %v520 = vsel %vm519, %v501, 0
    %522 = vmatprep.subr.mxu0 0.0
    %523 = vmatpush1.msra.mxu0 0.0
    %524 = vmatprep.subr.mxu0 0.0
    %525 = vmatpush1.msra.mxu0 0.0
    %526 = vmatprep.subr.mxu0 0.0
    %527 = vmatpush1.msra.mxu0 0.0
    %528 = vmatprep.subr.mxu0 0.0
    %529 = vmatpush1.msra.mxu0 0.0
    %530 = vmatprep.subr.mxu0 0.0
    %531 = vmatpush1.msra.mxu0 0.0
    %532 = vmatprep.subr.mxu0 0.0
    %533 = vmatpush1.msra.mxu0 0.0
    %534 = vmatprep.subr.mxu0 0.0
    %535 = vmatpush1.msra.mxu0 0.0
    %536 = vmatprep.subr.mxu0 0.0
    %537 = vmatpush1.msra.mxu0 0.0
    %538 = vmatprep.subr.mxu0 0.0
    %539 = vmatpush1.msra.mxu0 0.0
    %540 = vmatprep.subr.mxu0 0.0
    %541 = vmatpush1.msra.mxu0 0.0
    %542 = vmatprep.subr.mxu0 0.0
    %543 = vmatpush1.msra.mxu0 0.0
    %544 = vmatprep.subr.mxu0 0.0
    %545 = vmatpush1.msra.mxu0 0.0
    %546 = vmatprep.subr.mxu0 0.0
    %547 = vmatpush1.msra.mxu0 0.0
    %548 = vmatprep.subr.mxu0 0.0
    %549 = vmatpush1.msra.mxu0 0.0
    %550 = vmatprep.subr.mxu0 0.0
    %551 = vmatpush1.msra.mxu0 0.0
    %552 = vmatprep.subr.mxu0 0.0
    %553 = vmatpush1.msra.mxu0 %v77
    %554 = vmatprep.subr.mxu0 0.0
    %555 = vmatpush2.msra.mxu0 0.0
    %556 = vmatprep.subr.mxu0 0.0
    %557 = vmatpush2.msra.mxu0 0.0
    %558 = vmatprep.subr.mxu0 0.0
    %559 = vmatpush2.msra.mxu0 0.0
    %560 = vmatprep.subr.mxu0 0.0
    %561 = vmatpush2.msra.mxu0 0.0
    %562 = vmatprep.subr.mxu0 0.0
    %563 = vmatpush2.msra.mxu0 0.0
    %564 = vmatprep.subr.mxu0 0.0
    %565 = vmatpush2.msra.mxu0 0.0
    %566 = vmatprep.subr.mxu0 0.0
    %567 = vmatpush2.msra.mxu0 0.0
    %568 = vmatprep.subr.mxu0 0.0
    %569 = vmatpush2.msra.mxu0 0.0
    %570 = vmatprep.subr.mxu0 0.0
    %571 = vmatpush2.msra.mxu0 0.0
    %572 = vmatprep.subr.mxu0 0.0
    %573 = vmatpush2.msra.mxu0 0.0
    %574 = vmatprep.subr.mxu0 0.0
    %575 = vmatpush2.msra.mxu0 0.0
    %576 = vmatprep.subr.mxu0 0.0
    %577 = vmatpush2.msra.mxu0 0.0
    %578 = vmatprep.subr.mxu0 0.0
    %579 = vmatpush2.msra.mxu0 0.0
    %580 = vmatprep.subr.mxu0 0.0
    %581 = vmatpush2.msra.mxu0 0.0
    %582 = vmatprep.subr.mxu0 0.0
    %583 = vmatpush2.msra.mxu0 0.0
    %584 = vmatprep.subr.mxu0 0.0
    %585 = vmatpush2.msra.mxu0 0.0
    %586 = vmatprep.mubr.f32.mxu0 0.0
    %587 = vmatmul.mubr.f32.gmra.mxu0 %v520
    %v588 = vpop.f32.mrf.mxu0
    %v589 = vadd.f32 0.0, %v588
    %v590 = vpop.f32.mrf.mxu0
    %591 = vdwg.mxu0
    %v592 = vsel %vm519, %v505, 0
    %594 = vmatprep.subr.mxu0 0.0
    %595 = vmatpush1.msra.mxu0 0.0
    %596 = vmatprep.subr.mxu0 0.0
    %597 = vmatpush1.msra.mxu0 0.0
    %598 = vmatprep.subr.mxu0 0.0
    %599 = vmatpush1.msra.mxu0 0.0
    %600 = vmatprep.subr.mxu0 0.0
    %601 = vmatpush1.msra.mxu0 0.0
    %602 = vmatprep.subr.mxu0 0.0
    %603 = vmatpush1.msra.mxu0 0.0
    %604 = vmatprep.subr.mxu0 0.0
    %605 = vmatpush1.msra.mxu0 0.0
    %606 = vmatprep.subr.mxu0 0.0
    %607 = vmatpush1.msra.mxu0 0.0
    %608 = vmatprep.subr.mxu0 0.0
    %609 = vmatpush1.msra.mxu0 0.0
    %610 = vmatprep.subr.mxu0 0.0
    %611 = vmatpush1.msra.mxu0 0.0
    %612 = vmatprep.subr.mxu0 0.0
    %613 = vmatpush1.msra.mxu0 0.0
    %614 = vmatprep.subr.mxu0 0.0
    %615 = vmatpush1.msra.mxu0 0.0
    %616 = vmatprep.subr.mxu0 0.0
    %617 = vmatpush1.msra.mxu0 0.0
    %618 = vmatprep.subr.mxu0 0.0
    %619 = vmatpush1.msra.mxu0 0.0
    %620 = vmatprep.subr.mxu0 0.0
    %621 = vmatpush1.msra.mxu0 0.0
    %622 = vmatprep.subr.mxu0 0.0
    %623 = vmatpush1.msra.mxu0 0.0
    %624 = vmatprep.subr.mxu0 0.0
    %625 = vmatpush1.msra.mxu0 %v78
    %626 = vmatprep.subr.mxu0 0.0
    %627 = vmatpush2.msra.mxu0 0.0
    %628 = vmatprep.subr.mxu0 0.0
    %629 = vmatpush2.msra.mxu0 0.0
    %630 = vmatprep.subr.mxu0 0.0
    %631 = vmatpush2.msra.mxu0 0.0
    %632 = vmatprep.subr.mxu0 0.0
    %633 = vmatpush2.msra.mxu0 0.0
    %634 = vmatprep.subr.mxu0 0.0
    %635 = vmatpush2.msra.mxu0 0.0
    %636 = vmatprep.subr.mxu0 0.0
    %637 = vmatpush2.msra.mxu0 0.0
    %638 = vmatprep.subr.mxu0 0.0
    %639 = vmatpush2.msra.mxu0 0.0
    %640 = vmatprep.subr.mxu0 0.0
    %641 = vmatpush2.msra.mxu0 0.0
    %642 = vmatprep.subr.mxu0 0.0
    %643 = vmatpush2.msra.mxu0 0.0
    %644 = vmatprep.subr.mxu0 0.0
    %645 = vmatpush2.msra.mxu0 0.0
    %646 = vmatprep.subr.mxu0 0.0
    %647 = vmatpush2.msra.mxu0 0.0
    %648 = vmatprep.subr.mxu0 0.0
    %649 = vmatpush2.msra.mxu0 0.0
    %650 = vmatprep.subr.mxu0 0.0
    %651 = vmatpush2.msra.mxu0 0.0
    %652 = vmatprep.subr.mxu0 0.0
    %653 = vmatpush2.msra.mxu0 0.0
    %654 = vmatprep.subr.mxu0 0.0
    %655 = vmatpush2.msra.mxu0 0.0
    %656 = vmatprep.subr.mxu0 0.0
    %657 = vmatpush2.msra.mxu0 0.0
    %658 = vmatprep.mubr.f32.mxu0 0.0
    %659 = vmatmul.mubr.f32.gmra.mxu0 %v592
    %v660 = vpop.f32.mrf.mxu0
    %v661 = vadd.f32 0.0, %v660
    %v662 = vpop.f32.mrf.mxu0
    %663 = vdwg.mxu0
    %v664 = vsel %vm519, %v509, 0
    %666 = vmatprep.subr.mxu0 0.0
    %667 = vmatpush1.msra.mxu0 0.0
    %668 = vmatprep.subr.mxu0 0.0
    %669 = vmatpush1.msra.mxu0 0.0
    %670 = vmatprep.subr.mxu0 0.0
    %671 = vmatpush1.msra.mxu0 0.0
    %672 = vmatprep.subr.mxu0 0.0
    %673 = vmatpush1.msra.mxu0 0.0
    %674 = vmatprep.subr.mxu0 0.0
    %675 = vmatpush1.msra.mxu0 0.0
    %676 = vmatprep.subr.mxu0 0.0
    %677 = vmatpush1.msra.mxu0 0.0
    %678 = vmatprep.subr.mxu0 0.0
    %679 = vmatpush1.msra.mxu0 0.0
    %680 = vmatprep.subr.mxu0 0.0
    %681 = vmatpush1.msra.mxu0 0.0
    %682 = vmatprep.subr.mxu0 0.0
    %683 = vmatpush1.msra.mxu0 0.0
    %684 = vmatprep.subr.mxu0 0.0
    %685 = vmatpush1.msra.mxu0 0.0
    %686 = vmatprep.subr.mxu0 0.0
    %687 = vmatpush1.msra.mxu0 0.0
    %688 = vmatprep.subr.mxu0 0.0
    %689 = vmatpush1.msra.mxu0 0.0
    %690 = vmatprep.subr.mxu0 0.0
    %691 = vmatpush1.msra.mxu0 0.0
    %692 = vmatprep.subr.mxu0 0.0
    %693 = vmatpush1.msra.mxu0 0.0
    %694 = vmatprep.subr.mxu0 0.0
    %695 = vmatpush1.msra.mxu0 0.0
    %696 = vmatprep.subr.mxu0 0.0
    %697 = vmatpush1.msra.mxu0 %v79
    %698 = vmatprep.subr.mxu0 0.0
    %699 = vmatpush2.msra.mxu0 0.0
    %700 = vmatprep.subr.mxu0 0.0
    %701 = vmatpush2.msra.mxu0 0.0
    %702 = vmatprep.subr.mxu0 0.0
    %703 = vmatpush2.msra.mxu0 0.0
    %704 = vmatprep.subr.mxu0 0.0
    %705 = vmatpush2.msra.mxu0 0.0
    %706 = vmatprep.subr.mxu0 0.0
    %707 = vmatpush2.msra.mxu0 0.0
    %708 = vmatprep.subr.mxu0 0.0
    %709 = vmatpush2.msra.mxu0 0.0
    %710 = vmatprep.subr.mxu0 0.0
    %711 = vmatpush2.msra.mxu0 0.0
    %712 = vmatprep.subr.mxu0 0.0
    %713 = vmatpush2.msra.mxu0 0.0
    %714 = vmatprep.subr.mxu0 0.0
    %715 = vmatpush2.msra.mxu0 0.0
    %716 = vmatprep.subr.mxu0 0.0
    %717 = vmatpush2.msra.mxu0 0.0
    %718 = vmatprep.subr.mxu0 0.0
    %719 = vmatpush2.msra.mxu0 0.0
    %720 = vmatprep.subr.mxu0 0.0
    %721 = vmatpush2.msra.mxu0 0.0
    %722 = vmatprep.subr.mxu0 0.0
    %723 = vmatpush2.msra.mxu0 0.0
    %724 = vmatprep.subr.mxu0 0.0
    %725 = vmatpush2.msra.mxu0 0.0
    %726 = vmatprep.subr.mxu0 0.0
    %727 = vmatpush2.msra.mxu0 0.0
    %728 = vmatprep.subr.mxu0 0.0
    %729 = vmatpush2.msra.mxu0 0.0
    %730 = vmatprep.mubr.f32.mxu0 0.0
    %731 = vmatmul.mubr.f32.gmra.mxu0 %v664
    %v732 = vpop.f32.mrf.mxu0
    %v733 = vadd.f32 0.0, %v732
    %v734 = vpop.f32.mrf.mxu0
    %735 = vdwg.mxu0
    %v736 = vsel %vm519, %v513, 0
    %738 = vmatprep.subr.mxu0 0.0
    %739 = vmatpush1.msra.mxu0 0.0
    %740 = vmatprep.subr.mxu0 0.0
    %741 = vmatpush1.msra.mxu0 0.0
    %742 = vmatprep.subr.mxu0 0.0
    %743 = vmatpush1.msra.mxu0 0.0
    %744 = vmatprep.subr.mxu0 0.0
    %745 = vmatpush1.msra.mxu0 0.0
    %746 = vmatprep.subr.mxu0 0.0
    %747 = vmatpush1.msra.mxu0 0.0
    %748 = vmatprep.subr.mxu0 0.0
    %749 = vmatpush1.msra.mxu0 0.0
    %750 = vmatprep.subr.mxu0 0.0
    %751 = vmatpush1.msra.mxu0 0.0
    %752 = vmatprep.subr.mxu0 0.0
    %753 = vmatpush1.msra.mxu0 0.0
    %754 = vmatprep.subr.mxu0 0.0
    %755 = vmatpush1.msra.mxu0 0.0
    %756 = vmatprep.subr.mxu0 0.0
    %757 = vmatpush1.msra.mxu0 0.0
    %758 = vmatprep.subr.mxu0 0.0
    %759 = vmatpush1.msra.mxu0 0.0
    %760 = vmatprep.subr.mxu0 0.0
    %761 = vmatpush1.msra.mxu0 0.0
    %762 = vmatprep.subr.mxu0 0.0
    %763 = vmatpush1.msra.mxu0 0.0
    %764 = vmatprep.subr.mxu0 0.0
    %765 = vmatpush1.msra.mxu0 0.0
    %766 = vmatprep.subr.mxu0 0.0
    %767 = vmatpush1.msra.mxu0 0.0
    %768 = vmatprep.subr.mxu0 0.0
    %769 = vmatpush1.msra.mxu0 %v80
    %770 = vmatprep.subr.mxu0 0.0
    %771 = vmatpush2.msra.mxu0 0.0
    %772 = vmatprep.subr.mxu0 0.0
    %773 = vmatpush2.msra.mxu0 0.0
    %774 = vmatprep.subr.mxu0 0.0
    %775 = vmatpush2.msra.mxu0 0.0
    %776 = vmatprep.subr.mxu0 0.0
    %777 = vmatpush2.msra.mxu0 0.0
    %778 = vmatprep.subr.mxu0 0.0
    %779 = vmatpush2.msra.mxu0 0.0
    %780 = vmatprep.subr.mxu0 0.0
    %781 = vmatpush2.msra.mxu0 0.0
    %782 = vmatprep.subr.mxu0 0.0
    %783 = vmatpush2.msra.mxu0 0.0
    %784 = vmatprep.subr.mxu0 0.0
    %785 = vmatpush2.msra.mxu0 0.0
    %786 = vmatprep.subr.mxu0 0.0
    %787 = vmatpush2.msra.mxu0 0.0
    %788 = vmatprep.subr.mxu0 0.0
    %789 = vmatpush2.msra.mxu0 0.0
    %790 = vmatprep.subr.mxu0 0.0
    %791 = vmatpush2.msra.mxu0 0.0
    %792 = vmatprep.subr.mxu0 0.0
    %793 = vmatpush2.msra.mxu0 0.0
    %794 = vmatprep.subr.mxu0 0.0
    %795 = vmatpush2.msra.mxu0 0.0
    %796 = vmatprep.subr.mxu0 0.0
    %797 = vmatpush2.msra.mxu0 0.0
    %798 = vmatprep.subr.mxu0 0.0
    %799 = vmatpush2.msra.mxu0 0.0
    %800 = vmatprep.subr.mxu0 0.0
    %801 = vmatpush2.msra.mxu0 0.0
    %802 = vmatprep.mubr.f32.mxu0 0.0
    %803 = vmatmul.mubr.f32.gmra.mxu0 %v736
    %v804 = vpop.f32.mrf.mxu0
    %v805 = vadd.f32 0.0, %v804
    %v806 = vpop.f32.mrf.mxu0
    %807 = vdwg.mxu0
    %v812 = vrot.slane %v661, 7
    %v813 = vsel %vm371, %v812, %v589
    %v814 = vrot.slane %v733, 6
    %v815 = vsel %vm373, %v814, %v813
    %v816 = vrot.slane %v805, 5
    %v817 = vsel %vm375, %v816, %v815
    %vm819 = vcmask 257024
    %820 = vst.msk [vmem:[#allocation11] sm:$0xf] %vm819, %v817
    // Predicated region
    $region38: #{tpu_custom_call.1} parent=1 // pred_check
      _
    $region39: #{tpu_custom_call.1} parent=1 // pred_check_branch
      %822 = sbr.rel (0) target = $region41
    $region40: #{tpu_custom_call.1} parent=1 // pred_region
      %s824 = ssub.s32 64, 64
      %825 = vsyncadd [#allocation4], %s824
      %s827 = sshll.u32 [#allocation10], 4
      %s828 = int_to_ptr.vmem [resolvable:$true] %s827
      %830 = dma.vmem_to_hbm [thread:$0]  %s828, 64, %s5, [#allocation4]
    $region41: #{tpu_custom_call.1} parent=1 // pred_fallthru
      _
    // Predicated region
    $region42: #{tpu_custom_call.1} parent=1 // pred_check
      _
    $region43: #{tpu_custom_call.1} parent=1 // pred_check_branch
      %832 = sbr.rel (0) target = $region45
    $region44: #{tpu_custom_call.1} parent=1 // pred_region
      %s834 = ssub.s32 64, 64
      %835 = vsyncadd [#allocation12], %s834
      %s837 = sshll.u32 [#allocation11], 4
      %s838 = int_to_ptr.vmem [resolvable:$true] %s837
      %840 = dma.vmem_to_hbm [thread:$0]  %s838, 64, %s6, [#allocation12]
    $region45: #{tpu_custom_call.1} parent=1 // pred_fallthru
      _
    // Predicated region
    $region46: #{tpu_custom_call.1} parent=1 // pred_check
      _
    $region47: #{tpu_custom_call.1} parent=1 // pred_check_branch
      %842 = sbr.rel (0) target = $region49
    $region48: #{tpu_custom_call.1} parent=1 // pred_region
      %843 = dma.done [#allocation4], 64
    $region49: #{tpu_custom_call.1} parent=1 // pred_fallthru
      _
    // Predicated region
    $region50: #{tpu_custom_call.1} parent=1 // pred_check
      _
    $region51: #{tpu_custom_call.1} parent=1 // pred_check_branch
      %845 = sbr.rel (0) target = $region53
    $region52: #{tpu_custom_call.1} parent=1 // pred_region
      %846 = dma.done [#allocation12], 64
    $region53: #{tpu_custom_call.1} parent=1 // pred_fallthru
      _
    %847 = vsyncpa [#allocation3], 1
    %848 = vsyncpa [#allocation6], 1
    %849 = vsyncpa [#allocation9], 1
    %850 = vsyncpa [#allocation4], 1
    %851 = vsyncpa [#allocation12], 1

</llo_original>
